<compile_context>
chip_gen: v7x
topology: tpu7x:2x2x1
jax: 0.10.0
libtpu: 0.0.40
codegen_flags: <defaults>
</compile_context>

<pallas_src>
import jax
import jax.numpy as jnp
from jax.experimental import pallas as pl
from jax.experimental.pallas import tpu as pltpu

LANES = 128
MAX_BLOCK_ROWS = 2048  # 2048 x 128 x 4B = 1 MiB f32 tile per input


def _sublane_rows(dtype):
    # Sublane packing granularity per dtype (f32:8, bf16:16, int8/fp8:32).
    return {4: 8, 2: 16, 1: 32}.get(jnp.dtype(dtype).itemsize, 8)


def _make_kernel(block_rows, acc_rows, valid_rows, blocks_per_part, need_mask):
    def kernel(pred_ref, target_ref, out_ref, acc_ref):
        i = pl.program_id(1)

        # Reset the per-partition accumulator at the start of each partition.
        @pl.when(i == 0)
        def _init():
            acc_ref[...] = jnp.zeros_like(acc_ref)

        p = pred_ref[...].astype(jnp.float32)
        t = target_ref[...].astype(jnp.float32)
        diff = p - t
        # weight = 3 where target >= 0.5 else 1 (matches the PyTorch masked assign)
        w = jnp.where(t >= jnp.float32(0.5), jnp.float32(3.0), jnp.float32(1.0))
        x = diff * diff * w

        if need_mask:
            # Mask rows past the end of the real data (ragged last block and
            # any phantom block introduced by the 2-way partition split).
            b = pl.program_id(0) * blocks_per_part + i  # logical block index
            row0 = b * block_rows
            row_ids = row0 + jax.lax.broadcasted_iota(
                jnp.int32, (block_rows, LANES), 0)
            x = jnp.where(row_ids < valid_rows, x, jnp.float32(0.0))

        # Fold the tile into a single-vreg accumulator (VPU adds only; the
        # reshape is aligned to (8,128) vreg tiles so it is layout-free).
        if block_rows == acc_rows:
            acc_ref[...] += x
        else:
            acc_ref[...] += jnp.sum(
                x.reshape(block_rows // acc_rows, acc_rows, LANES), axis=0)

        # Last step of this partition: one cross-lane reduce to SMEM scalar.
        @pl.when(i == pl.num_programs(1) - 1)
        def _fin():
            out_ref[0, 0] = jnp.sum(acc_ref[...])

    return kernel


def weighted_mse_loss(pred, target, size_average=True):
    assert pred.shape == target.shape
    n_elems = int(pred.size)

    # Flatten in native dtype (no f32 materialization in HBM).
    flat_p = jnp.ravel(pred)
    flat_t = jnp.ravel(target)

    # Pad only to a multiple of the 128-lane width when necessary. Zero
    # padding is harmless: diff = 0 there regardless of the weight.
    pad = (-n_elems) % LANES
    if pad:
        flat_p = jnp.pad(flat_p, (0, pad))
        flat_t = jnp.pad(flat_t, (0, pad))
    rows = (n_elems + pad) // LANES

    p2 = flat_p.reshape(rows, LANES)
    t2 = flat_t.reshape(rows, LANES)

    # Pick the block height: big (1 MiB) when there is enough data, otherwise
    # a sublane-aligned block (or the full array for tiny inputs).
    sub = max(_sublane_rows(p2.dtype), _sublane_rows(t2.dtype))
    if rows >= MAX_BLOCK_ROWS:
        block_rows = MAX_BLOCK_ROWS
    elif rows % sub == 0:
        block_rows = rows
    elif rows > sub:
        block_rows = (rows // sub) * sub
    else:
        block_rows = rows  # block equals the full (tiny) array dim

    total_blocks = pl.cdiv(rows, block_rows)
    # Two partial sums -> both TensorCores on v7x; negligible cost elsewhere.
    num_parts = 2 if total_blocks >= 2 else 1
    blocks_per_part = pl.cdiv(total_blocks, num_parts)
    need_mask = (rows % block_rows != 0) or (
        num_parts * blocks_per_part != total_blocks)
    acc_rows = 8 if block_rows % 8 == 0 else block_rows

    def in_map(part, i):
        # Clamp so a phantom step in an uneven split never DMAs out of bounds
        # (its contribution is zeroed by the in-kernel row mask).
        b = jnp.minimum(part * blocks_per_part + i, total_blocks - 1)
        return (b, 0)

    kernel = _make_kernel(block_rows, acc_rows, rows, blocks_per_part,
                          need_mask)

    bytes_accessed = n_elems * (p2.dtype.itemsize + t2.dtype.itemsize) \
        + 4 * num_parts
    cost = pl.CostEstimate(flops=5 * n_elems, transcendentals=0,
                           bytes_accessed=bytes_accessed)

    partials = pl.pallas_call(
        kernel,
        out_shape=jax.ShapeDtypeStruct((num_parts, 1), jnp.float32),
        grid_spec=pltpu.PrefetchScalarGridSpec(
            num_scalar_prefetch=0,
            grid=(num_parts, blocks_per_part),
            in_specs=[
                pl.BlockSpec((block_rows, LANES), in_map),
                pl.BlockSpec((block_rows, LANES), in_map),
            ],
            out_specs=pl.BlockSpec((1, 1), lambda p, i: (p, 0),
                                   memory_space=pltpu.SMEM),
            scratch_shapes=[pltpu.VMEM((acc_rows, LANES), jnp.float32)],
        ),
        compiler_params=pltpu.CompilerParams(
            dimension_semantics=("parallel", "arbitrary"),
        ),
        cost_estimate=cost,
    )(p2, t2)

    total = jnp.sum(partials)
    if size_average:
        return total / jnp.float32(n_elems)
    return total


class MSELoss:
    """Mirror of the PyTorch module's forward pass."""

    def __init__(self, size_average=True):
        self.size_average = size_average

    def __call__(self, pred, target):
        return weighted_mse_loss(pred, target, self.size_average)


if __name__ == "__main__":
    key = jax.random.PRNGKey(0)

    def ref_loss(pred, target, size_average=True):
        w = jnp.where(target >= 0.5, 3.0, 1.0)
        l = (pred - target) ** 2 * w
        return jnp.mean(l) if size_average else jnp.sum(l)

    # Primary small case consistent with an NCHW prediction map.
    kp, kt = jax.random.split(key)
    pred = jax.random.uniform(kp, (2, 4, 16, 16), dtype=jnp.float32)
    target = jax.random.uniform(kt, (2, 4, 16, 16), dtype=jnp.float32)

    loss_fn = MSELoss(size_average=True)
    out = jax.block_until_ready(loss_fn(pred, target))
    ref = ref_loss(pred, target, True)
    assert jnp.allclose(out, ref, rtol=1e-5, atol=1e-6), (out, ref)

    out_sum = jax.block_until_ready(
        weighted_mse_loss(pred, target, size_average=False))
    ref_sum = ref_loss(pred, target, False)
    assert jnp.allclose(out_sum, ref_sum, rtol=1e-5, atol=1e-6), (out_sum, ref_sum)

    # Larger cases exercising multi-block tiles, the 2-way parallel split,
    # ragged-tail masking, the clamped phantom block, and lane padding.
    for shape in [(4, 8, 128, 130), (3, 5, 37, 53)]:
        k1, k2, key = jax.random.split(key, 3)
        p = jax.random.uniform(k1, shape, dtype=jnp.float32)
        t = jax.random.uniform(k2, shape, dtype=jnp.float32)
        o = jax.block_until_ready(weighted_mse_loss(p, t, size_average=True))
        r = ref_loss(p, t, True)
        assert jnp.allclose(o, r, rtol=1e-4, atol=1e-6), (shape, o, r)

    print("KERNEL_OK")
</pallas_src>

<mosaic_0001>
module attributes {stable_mosaic.version = 11 : i64} {
  func.func @kernel(%arg0: i32, %arg1: i32, %arg2: memref<16x128xf32, #tpu.memory_space<vmem>>, %arg3: memref<16x128xf32, #tpu.memory_space<vmem>>, %arg4: memref<1x1xf32, #tpu.memory_space<smem>>, %arg5: memref<8x128xf32, #tpu.memory_space<vmem>>) attributes {dimension_semantics = [#tpu.dimension_semantics<parallel>, #tpu.dimension_semantics<arbitrary>], iteration_bounds = array<i64: 1, 1>, scalar_prefetch = 0 : i64, scratch_operands = 1 : i64, tpu.core_type = #tpu.core_type<tc>, window_params = [{transform_indices = @transform_0, window_bounds = array<i64: 16, 128>}, {transform_indices = @transform_1, window_bounds = array<i64: 16, 128>}, {transform_indices = @transform_2, window_bounds = array<i64: 1, 1>}]} {
    %c0_i32 = arith.constant 0 : i32
    %0 = arith.cmpi eq, %arg1, %c0_i32 : i32
    %1 = arith.extui %0 : i1 to i32
    %c0_i32_0 = arith.constant 0 : i32
    %2 = arith.cmpi ne, %1, %c0_i32_0 : i32
    scf.if %2 {
      %cst_13 = arith.constant 0.000000e+00 : f32
      %21 = vector.broadcast %cst_13 : f32 to vector<8x128xf32>
      %c0_14 = arith.constant 0 : index
      %c0_15 = arith.constant 0 : index
      %22 = vector.load %arg5[%c0_14, %c0_15] : memref<8x128xf32, #tpu.memory_space<vmem>>, vector<8x128xf32>
      tpu.vector_store %arg5[%c0_14, %c0_15], %21 {strides = array<i32>} : memref<8x128xf32, #tpu.memory_space<vmem>>, vector<8x128xf32>,
    } else {
    }
    %c0 = arith.constant 0 : index
    %c0_1 = arith.constant 0 : index
    %3 = vector.load %arg2[%c0, %c0_1] : memref<16x128xf32, #tpu.memory_space<vmem>>, vector<16x128xf32>
    %c0_2 = arith.constant 0 : index
    %c0_3 = arith.constant 0 : index
    %4 = vector.load %arg3[%c0_2, %c0_3] : memref<16x128xf32, #tpu.memory_space<vmem>>, vector<16x128xf32>
    %5 = arith.subf %3, %4 : vector<16x128xf32>
    %cst = arith.constant 5.000000e-01 : f32
    %6 = vector.broadcast %cst : f32 to vector<16x128xf32>
    %7 = arith.cmpf oge, %4, %6 : vector<16x128xf32>
    %cst_4 = arith.constant 3.000000e+00 : f32
    %cst_5 = arith.constant 1.000000e+00 : f32
    %8 = vector.broadcast %cst_4 : f32 to vector<16x128xf32>
    %9 = vector.broadcast %cst_5 : f32 to vector<16x128xf32>
    %10 = arith.select %7, %8, %9 : vector<16x128xi1>, vector<16x128xf32>
    %11 = arith.mulf %5, %5 : vector<16x128xf32>
    %12 = arith.mulf %11, %10 : vector<16x128xf32>
    %c0_6 = arith.constant 0 : index
    %c0_7 = arith.constant 0 : index
    %13 = vector.load %arg5[%c0_6, %c0_7] : memref<8x128xf32, #tpu.memory_space<vmem>>, vector<8x128xf32>
    %14 = vector.shape_cast %12 : vector<16x128xf32> to vector<2x8x128xf32>
    %cst_8 = arith.constant dense<0.000000e+00> : vector<8x128xf32>
    %15 = vector.multi_reduction <add>, %14, %cst_8 [0] : vector<2x8x128xf32> to vector<8x128xf32>
    %16 = arith.addf %13, %15 : vector<8x128xf32>
    %c0_9 = arith.constant 0 : index
    %c0_10 = arith.constant 0 : index
    %17 = vector.load %arg5[%c0_9, %c0_10] : memref<8x128xf32, #tpu.memory_space<vmem>>, vector<8x128xf32>
    tpu.vector_store %arg5[%c0_9, %c0_10], %16 {strides = array<i32>} : memref<8x128xf32, #tpu.memory_space<vmem>>, vector<8x128xf32>,
    %c0_i32_11 = arith.constant 0 : i32
    %18 = arith.cmpi eq, %arg1, %c0_i32_11 : i32
    %19 = arith.extui %18 : i1 to i32
    %c0_i32_12 = arith.constant 0 : i32
    %20 = arith.cmpi ne, %19, %c0_i32_12 : i32
    scf.if %20 {
      %c0_13 = arith.constant 0 : index
      %c0_14 = arith.constant 0 : index
      %21 = vector.load %arg5[%c0_13, %c0_14] : memref<8x128xf32, #tpu.memory_space<vmem>>, vector<8x128xf32>
      %22 = vector.shape_cast %21 : vector<8x128xf32> to vector<1x8x128xf32>
      %cst_15 = arith.constant dense<0.000000e+00> : vector<1xf32>
      %23 = vector.multi_reduction <add>, %22, %cst_15 [1, 2] : vector<1x8x128xf32> to vector<1xf32>
      %24 = vector.shape_cast %23 : vector<1xf32> to vector<1x1x1xf32>
      %25 = vector.extract %24[0, 0, 0] : f32 from vector<1x1x1xf32>
      %c0_16 = arith.constant 0 : index
      %c0_17 = arith.constant 0 : index
      %26 = memref.load %arg4[%c0_16, %c0_17] : memref<1x1xf32, #tpu.memory_space<smem>>
      memref.store %25, %arg4[%c0_16, %c0_17] : memref<1x1xf32, #tpu.memory_space<smem>>
    } else {
    }
    return
  }
  func.func @transform_0(%arg0: i32, %arg1: i32) -> (i32, i32) {
    %c1_i32 = arith.constant 1 : i32
    %0 = arith.muli %arg0, %c1_i32 : i32
    %1 = arith.addi %0, %arg1 : i32
    %c0_i32 = arith.constant 0 : i32
    %2 = arith.minsi %1, %c0_i32 : i32
    %c0_i32_0 = arith.constant 0 : i32
    %c0_i32_1 = arith.constant 0 : i32
    return %2, %c0_i32_0 : i32, i32
  }
  func.func @transform_1(%arg0: i32, %arg1: i32) -> (i32, i32) {
    %c1_i32 = arith.constant 1 : i32
    %0 = arith.muli %arg0, %c1_i32 : i32
    %1 = arith.addi %0, %arg1 : i32
    %c0_i32 = arith.constant 0 : i32
    %2 = arith.minsi %1, %c0_i32 : i32
    %c0_i32_0 = arith.constant 0 : i32
    %c0_i32_1 = arith.constant 0 : i32
    return %2, %c0_i32_0 : i32, i32
  }
  func.func @transform_2(%arg0: i32, %arg1: i32) -> (i32, i32) {
    %c0_i32 = arith.constant 0 : i32
    %c0_i32_0 = arith.constant 0 : i32
    return %arg0, %c0_i32 : i32, i32
  }
}

</mosaic_0001>

<llo_original>
// kernel: tpu_custom_call.1
$region0: #{tpu_custom_call.1}
  #allocation0 [shape = 'u32[]', space=smem, size = 0x4, offset = 0x4, fixed_abs, tag = 'smem constant byte address 0x4 - core index']
  #allocation1 [shape = 'u32[144,128]{1,0:T(1,128)}', space=vmem, size = 0x12000, scoped, tag = 'internal scratch']
  #allocation2 [shape = 'f32[8,128]{1,0:T(8,128)}', space=vmem, size = 0x1000, scoped, tag = 'scratch operand']
  %s0 = inlined_call_operand.hbm [shape: f32[16,128], index: 0, kind: input, shape index: {}]
  %s1 = inlined_call_operand.hbm [shape: f32[16,128], index: 1, kind: input, shape index: {}]
  %s2 = inlined_call_operand.hbm [shape: f32[1,1], index: 2, kind: output, shape index: {}]
  %s3 = sld [smem:[#allocation0]]
  $region34: #{tpu_custom_call.1} parent=0
    _
  %s5 = ssub.s32 1, %s3
  %s6 = scalar_select 0, %s5, %s3
  $region1: #{tpu_custom_call.1} parent=0
    #allocation3 [shape = 'u8[8192]{0}', space=vmem, size = 0x2000, scoped, tag = 'input window, operand 0, single buffered']
    #allocation4 [shape = 's32[1]{0}', space=sflag, size = 0x4, scoped, tag = 'scoped memory for tpu_custom_call.1']
    #allocation5 [shape = 's32[1]{0}', space=sflag, size = 0x4, scoped, tag = 'scoped memory for tpu_custom_call.1']
    #allocation6 [shape = 'u8[8192]{0}', space=vmem, size = 0x2000, scoped, tag = 'input window, operand 1, single buffered']
    #allocation7 [shape = 's32[1]{0}', space=sflag, size = 0x4, scoped, tag = 'scoped memory for tpu_custom_call.1']
    #allocation8 [shape = 'u8[512]{0}', space=smem, size = 0x200, scoped, tag = 'output window, operand 0, single buffered']
    %7 = vsyncpa [#allocation4], 0
    %8 = vsyncpa [#allocation7], 0
    %9 = vsyncpa [#allocation5], 0
    // Predicated region
    $region2: #{tpu_custom_call.1} parent=1 // pred_check
      _
    $region3: #{tpu_custom_call.1} parent=1 // pred_check_branch
      %11 = sbr.rel (0) target = $region5
    $region4: #{tpu_custom_call.1} parent=1 // pred_region
      %s12 = sadd.s32 0, 0
      %p13 = scmp.lt.s32.totalorder %s12, 0
      %s14 = scalar_select %p13, %s12, 0
      %s15 = smul.u32 2, %s14
      %s17 = ssub.s32 256, 256
      %18 = vsyncadd [#allocation4], %s17
      %s19 = smul.addr %s15, 128
      %s20 = scalar_lea.hbm %s0, %s19
      %s21 = sshll.u32 [#allocation3], 4
      %s22 = int_to_ptr.vmem [resolvable:$true] %s21
      %27 = dma.hbm_to_vmem [thread:$0]  %s20, 256, %s22, [#allocation4], 128, 128, 8
    $region5: #{tpu_custom_call.1} parent=1 // pred_fallthru
      _
    // Predicated region
    $region6: #{tpu_custom_call.1} parent=1 // pred_check
      _
    $region7: #{tpu_custom_call.1} parent=1 // pred_check_branch
      %29 = sbr.rel (0) target = $region9
    $region8: #{tpu_custom_call.1} parent=1 // pred_region
      %s30 = sadd.s32 0, 0
      %p31 = scmp.lt.s32.totalorder %s30, 0
      %s32 = scalar_select %p31, %s30, 0
      %s33 = smul.u32 2, %s32
      %s35 = ssub.s32 256, 256
      %36 = vsyncadd [#allocation7], %s35
      %s37 = smul.addr %s33, 128
      %s38 = scalar_lea.hbm %s1, %s37
      %s39 = sshll.u32 [#allocation6], 4
      %s40 = int_to_ptr.vmem [resolvable:$true] %s39
      %45 = dma.hbm_to_vmem [thread:$0]  %s38, 256, %s40, [#allocation7], 128, 128, 8
    $region9: #{tpu_custom_call.1} parent=1 // pred_fallthru
      _
    // Predicated region
    $region10: #{tpu_custom_call.1} parent=1 // pred_check
      _
    $region11: #{tpu_custom_call.1} parent=1 // pred_check_branch
      %47 = sbr.rel (0) target = $region13
    $region12: #{tpu_custom_call.1} parent=1 // pred_region
      %48 = dma.done [#allocation4], 256
    $region13: #{tpu_custom_call.1} parent=1 // pred_fallthru
      _
    // Predicated region
    $region14: #{tpu_custom_call.1} parent=1 // pred_check
      _
    $region15: #{tpu_custom_call.1} parent=1 // pred_check_branch
      %50 = sbr.rel (0) target = $region17
    $region16: #{tpu_custom_call.1} parent=1 // pred_region
      %51 = dma.done [#allocation7], 256
    $region17: #{tpu_custom_call.1} parent=1 // pred_fallthru
      _
    %s52 = sadd.s32 0, 0
    %p53 = scmp.lt.s32.totalorder %s52, 0
    %s54 = scalar_select %p53, %s52, 0
    %s55 = smul.u32 2, %s54
    %s56 = sadd.s32 0, 0
    %p57 = scmp.lt.s32.totalorder %s56, 0
    %s58 = scalar_select %p57, %s56, 0
    %s59 = smul.u32 2, %s58
    %p60 = scmp.eq.s32.totalorder 0, 0
    // Predicated region
    $region18: #{tpu_custom_call.1} parent=1 // pred_check
      %p61 = pneg %p60
    $region19: #{tpu_custom_call.1} parent=1 // pred_check_branch
      %63 = sbr.rel (%p61) target = $region21
    $region20: #{tpu_custom_call.1} parent=1 // pred_region
      %64 = vst [vmem:[#allocation2] sm:$0xff] 0.0
    $region21: #{tpu_custom_call.1} parent=1 // pred_fallthru
      _
    %v65 = vld [vmem:[#allocation3] sm:$0xff]
    %v66 = vld [vmem:[#allocation3 + $0x8] sm:$0xff]
    %v67 = vld [vmem:[#allocation6] sm:$0xff]
    %v68 = vld [vmem:[#allocation6 + $0x8] sm:$0xff]
    %v69 = vsub.f32 %v65, %v67
    %v70 = vsub.f32 %v66, %v68
    %vm71 = vcmp.ge.f32.partialorder %v67, 0.5
    %vm72 = vcmp.ge.f32.partialorder %v68, 0.5
    %v73 = vsel %vm71, 3.0, 1.0
    %v74 = vsel %vm72, 3.0, 1.0
    %v75 = vmul.f32 %v69, %v69
    %v76 = vmul.f32 %v70, %v70
    %v77 = vmul.f32 %v75, %v73
    %v78 = vmul.f32 %v76, %v74
    %v79 = vld [vmem:[#allocation2] sm:$0xff]
    %v80 = vadd.f32 %v77, %v78
    %v81 = vadd.f32 %v79, %v80
    %82 = vst [vmem:[#allocation2] sm:$0xff] %v81
    // Predicated region
    $region22: #{tpu_custom_call.1} parent=1 // pred_check
      %p83 = pneg %p60
    $region23: #{tpu_custom_call.1} parent=1 // pred_check_branch
      %85 = sbr.rel (%p83) target = $region25
    $region24: #{tpu_custom_call.1} parent=1 // pred_region
      %v86 = vld [vmem:[#allocation2] sm:$0xff]
      %87 = vadd.xlane.f32.xlu0 %v86
      %v88 = vpop.xlane.xlu0 %87
      %v89 = vrot.slane %v88, 4
      %v90 = vadd.f32 %v88, %v89
      %v91 = vrot.slane %v90, 2
      %v92 = vadd.f32 %v90, %v91
      %v93 = vrot.slane %v92, 1
      %v94 = vadd.f32 %v92, %v93
      %s95 = vtos %v94
      %s96 = scalar_lea.smem [#allocation8], 0
      %97 = sst [smem:[%s96]] %s95
    $region25: #{tpu_custom_call.1} parent=1 // pred_fallthru
      _
    // Predicated region
    $region26: #{tpu_custom_call.1} parent=1 // pred_check
      _
    $region27: #{tpu_custom_call.1} parent=1 // pred_check_branch
      %99 = sbr.rel (0) target = $region29
    $region28: #{tpu_custom_call.1} parent=1 // pred_region
      %s101 = ssub.s32 16, 16
      %102 = vsyncadd [#allocation5], %s101
      %105 = dma.smem_to_hbm [#allocation8], 16, %s2, [#allocation5]
    $region29: #{tpu_custom_call.1} parent=1 // pred_fallthru
      _
    // Predicated region
    $region30: #{tpu_custom_call.1} parent=1 // pred_check
      _
    $region31: #{tpu_custom_call.1} parent=1 // pred_check_branch
      %107 = sbr.rel (0) target = $region33
    $region32: #{tpu_custom_call.1} parent=1 // pred_region
      %108 = dma.done [#allocation5], 16
    $region33: #{tpu_custom_call.1} parent=1 // pred_fallthru
      _
    %109 = sfence
    %110 = vsyncpa [#allocation4], 1
    %111 = vsyncpa [#allocation7], 1
    %112 = vsyncpa [#allocation5], 1

</llo_original>
